<compile_context>
chip_gen: v6e
topology: v6e:2x2x1
jax: 0.10.0
libtpu: 0.0.40
codegen_flags: <defaults>
</compile_context>

<pallas_src>
import jax
import jax.numpy as jnp
from jax import lax
from jax.experimental import pallas as pl
from jax.experimental.pallas import tpu as pltpu


def fusion_kernel(lu_ref, enc_ref, msk_ref, wf_ref, wl_ref, bias_ref,
                  pl_ref, fused_ref, fused_acc_ref):
    Bb, N, S, H = enc_ref.shape
    b0 = pl.program_id(0) * Bb

    wf = wf_ref[...].astype(jnp.float32)           # (1, H) lane-dense weight rows
    wl = wl_ref[...].astype(jnp.float32)           # (1, H)
    bias = bias_ref[...].astype(jnp.float32)       # (1, 1)

    # Hoisted per-grid-step constants (JAX does not CSE broadcasts in loops).
    sidx = lax.broadcasted_iota(jnp.int32, (S, H), 0)   # sequence position / sublane
    lidx = lax.broadcasted_iota(jnp.int32, (1, N), 1)   # candidate index / lane
    ridx = lax.broadcasted_iota(jnp.int32, (2, N), 0)   # row selector for probs/logits
    wf_row0 = jnp.where(sidx == 0, wf, 0.0)             # wf placed on token-0 row (S, H)

    def per_batch(i, carry):
        # ---- dynamic [start, end) last-utterance span (SMEM scalars) ----
        start = lu_ref[2 * (b0 + i)]
        end = lu_ref[2 * (b0 + i) + 1]
        inv_cnt = 1.0 / jnp.maximum(end - start, 1).astype(jnp.float32)  # empty-span guard
        sel = jnp.logical_and(sidx >= start, sidx < end).astype(jnp.float32)
        # head[s,h] = wl[h]*sel[s]/cnt + wf[h]*(s==0): logit_n = sum(enc_n * head) + b
        head = sel * (wl * inv_cnt) + wf_row0                            # (S, H)

        # ---- pass 1: per-candidate logits, candidate axis kept on lanes ----
        def logit_step(n, lg_row):
            e = enc_ref[i, n].astype(jnp.float32)                        # (S, H) slice
            c = jnp.sum(jnp.sum(e * head, axis=1, keepdims=True),
                        axis=0, keepdims=True)                           # (1, 1)
            return lg_row + jnp.where(lidx == n, c, 0.0)

        logits_row = lax.fori_loop(0, N, logit_step,
                                   jnp.zeros((1, N), jnp.float32)) + bias  # (1, N)

        # ---- softmax over the candidate axis (torch dim=1) ----
        m = jnp.max(logits_row, axis=1, keepdims=True)
        ex = jnp.exp(logits_row - m)
        probs_row = ex / jnp.sum(ex, axis=1, keepdims=True)               # (1, N)

        # single dense (2, N) writeback: row 0 = probs, row 1 = logits
        pl_ref[i] = jnp.where(ridx == 0, probs_row, logits_row).astype(pl_ref.dtype)

        # ---- pass 2: fused = sum_n probs[n] * mask[n,s] * enc[n,s,h] ----
        # masks arrive lane-dense as (N, S); one small transpose per batch element.
        w = msk_ref[i].astype(jnp.float32).T * probs_row                  # (S, N)
        fused_acc_ref[...] = jnp.zeros_like(fused_acc_ref)

        def fused_step(n, c2):
            e = enc_ref[i, n].astype(jnp.float32)                         # (S, H) slice
            w_col = jnp.sum(w * jnp.where(lidx == n, 1.0, 0.0),
                            axis=1, keepdims=True)                        # (S, 1)
            fused_acc_ref[...] = fused_acc_ref[...] + w_col * e
            return c2

        lax.fori_loop(0, N, fused_step, 0)
        fused_ref[i] = fused_acc_ref[...].astype(fused_ref.dtype)
        return carry

    lax.fori_loop(0, Bb, per_batch, 0)


def _round_up(x, m):
    return -(-x // m) * m


def _tile_bytes(rows, cols, itemsize):
    """VMEM bytes of a (rows, cols) tile after sublane/lane padding."""
    sub = {4: 8, 2: 16, 1: 32}.get(int(itemsize), 8)
    return _round_up(max(rows, 1), sub) * _round_up(max(cols, 1), 128) * int(itemsize)


def _device_vmem_params():
    """Per-generation VMEM budget and grid preferences."""
    kind = ""
    try:
        kind = jax.devices()[0].device_kind.lower()
    except Exception:
        pass
    if "v7" in kind or "7x" in kind:
        # v7x: 64 MiB physical VMEM / core, 2 TensorCores -> keep headroom and
        # an even grid length >= 2 so the 'parallel' axis splits across cores.
        return dict(budget=36 << 20, hard_cap=48 << 20,
                    min_grid_steps=2, prefer_even_grid=True)
    if any(t in kind for t in ("v5e", "v5 lite", "v5litepod", "v6")):
        # 128 MiB physical VMEM, single TensorCore: big tiles, 1 grid step is fine.
        return dict(budget=80 << 20, hard_cap=100 << 20,
                    min_grid_steps=1, prefer_even_grid=False)
    # Unknown chip: conservative defaults.
    return dict(budget=32 << 20, hard_cap=64 << 20,
                min_grid_steps=1, prefer_even_grid=False)


def _pick_batch_block(B, per_elem_bytes, fixed_bytes, budget, min_grid_steps,
                      prefer_even_grid):
    fit = max(1, (budget - fixed_bytes) // max(per_elem_bytes, 1))
    cap = max(1, min(B, fit))
    if min_grid_steps > 1 and B >= min_grid_steps:
        cap = min(cap, max(1, B // min_grid_steps))
    divisors = [d for d in range(1, B + 1) if B % d == 0 and d <= cap]
    if prefer_even_grid:
        even = [d for d in divisors if (B // d) % 2 == 0]
        if even:
            return max(even)
    return max(divisors) if divisors else 1


def fusion_forward(enc_outputs, masks, lu_indx, weight, bias):
    """weight: (1, 2H) torch-Linear layout, bias: (1,). Returns (probs, logits, fused)."""
    B, N, S, H = enc_outputs.shape
    out_dtype = enc_outputs.dtype
    enc_isz = jnp.dtype(enc_outputs.dtype).itemsize
    msk_isz = jnp.dtype(masks.dtype).itemsize
    fus_isz = jnp.dtype(out_dtype).itemsize

    dev = _device_vmem_params()

    # Double-buffered streamed tiles per batch element + fixed in-kernel temps
    # (temps are bounded by one (S,H) candidate slice thanks to the fori_loops).
    per_elem = 2 * (N * _tile_bytes(S, H, enc_isz)        # enc block
                    + _tile_bytes(N, S, msk_isz)          # masks block (lane-dense)
                    + _tile_bytes(2, N, 4)                # probs/logits block
                    + _tile_bytes(S, H, fus_isz))         # fused block
    fixed = (7 * _tile_bytes(S, H, 4)                     # head/sel, e slices, acc scratch
             + 2 * _tile_bytes(S, N, 4))                  # transposed mask weights
    Bb = _pick_batch_block(B, per_elem, fixed, dev["budget"],
                           dev["min_grid_steps"], dev["prefer_even_grid"])
    work_bytes = Bb * per_elem + fixed
    if work_bytes > dev["hard_cap"]:
        # TODO(synk): stream over S-chunks (second grid axis) when one batch
        # element does not fit the per-core VMEM budget.
        raise ValueError(
            f"Fusion kernel working set ({work_bytes >> 20} MiB) exceeds the "
            f"per-core VMEM cap ({dev['hard_cap'] >> 20} MiB) for shapes "
            f"B={B}, N={N}, S={S}, H={H}.")
    vmem_limit = int(min(dev["hard_cap"], max(32 << 20, work_bytes + (4 << 20))))
    grid = (B // Bb,)

    # Lane-dense (1, H) weight rows for the split linear head.
    wf = weight[:, :H].astype(jnp.float32)        # acts on candidate token 0
    wl = weight[:, H:].astype(jnp.float32)        # acts on last-utterance mean
    bias2 = jnp.asarray(bias, jnp.float32).reshape(1, 1)
    lu_flat = jnp.asarray(lu_indx, jnp.int32).reshape(-1)   # 1-D: cheap in SMEM

    grid_spec = pltpu.PrefetchScalarGridSpec(
        num_scalar_prefetch=1,
        grid=grid,
        in_specs=[
            pl.BlockSpec((Bb, N, S, H), lambda b, lu: (b, 0, 0, 0)),
            pl.BlockSpec((Bb, N, S), lambda b, lu: (b, 0, 0)),
            pl.BlockSpec((1, H), lambda b, lu: (0, 0)),
            pl.BlockSpec((1, H), lambda b, lu: (0, 0)),
            pl.BlockSpec((1, 1), lambda b, lu: (0, 0)),
        ],
        out_specs=[
            pl.BlockSpec((Bb, 2, N), lambda b, lu: (b, 0, 0)),
            pl.BlockSpec((Bb, S, H), lambda b, lu: (b, 0, 0)),
        ],
        scratch_shapes=[pltpu.VMEM((S, H), jnp.float32)],
    )

    cost = pl.CostEstimate(
        flops=6 * B * N * S * H,                       # trivial vs bytes moved
        transcendentals=B * N,                         # softmax exp
        bytes_accessed=(B * N * S * H * enc_isz        # enc read
                        + B * N * S * msk_isz          # mask read
                        + B * S * H * fus_isz          # fused write
                        + 2 * B * N * 4),              # probs/logits write
    )

    pl_out, fused = pl.pallas_call(
        fusion_kernel,
        grid_spec=grid_spec,
        out_shape=(
            jax.ShapeDtypeStruct((B, 2, N), jnp.float32),
            jax.ShapeDtypeStruct((B, S, H), out_dtype),
        ),
        compiler_params=pltpu.CompilerParams(
            dimension_semantics=("parallel",),
            vmem_limit_bytes=vmem_limit,
        ),
        cost_estimate=cost,
    )(lu_flat, enc_outputs, masks, wf, wl, bias2)

    probs = pl_out[:, 0, :, None].astype(out_dtype)     # (B, N, 1)
    logits = pl_out[:, 1, :, None].astype(out_dtype)    # (B, N, 1)
    return probs, logits, fused


def fusion_reference(enc_outputs, masks, lu_indx_np, weight, bias):
    """Pure-JAX reference mirroring the PyTorch forward (python-int slicing)."""
    B = enc_outputs.shape[0]
    first = enc_outputs[:, :, 0, :]
    lu = jnp.stack(
        [enc_outputs[i, :, int(lu_indx_np[i, 0]):int(lu_indx_np[i, 1]), :].mean(1)
         for i in range(B)], axis=0)
    cp = jnp.concatenate([first, lu], axis=-1)
    logits = cp @ weight.T + bias
    probs = jax.nn.softmax(logits, axis=1)
    fused = (probs[..., None] * masks[..., None] * enc_outputs).sum(1)
    return probs, logits, fused


if __name__ == "__main__":
    import numpy as np

    # batch, candidates, seq, hidden (H kept a multiple of 128 for lane density)
    B, N, S, H = 4, 4, 16, 128
    key = jax.random.PRNGKey(0)
    k1, k2, k3, k4 = jax.random.split(key, 4)

    enc_outputs = jax.random.normal(k1, (B, N, S, H), dtype=jnp.float32)
    masks = (jax.random.uniform(k2, (B, N, S)) > 0.3).astype(jnp.float32)
    lu_indx = jnp.array([[2, 6], [1, 5], [0, 4], [3, 9]], dtype=jnp.int32)

    # nn.Linear(2H, 1) parameters, deterministic init
    clf_weight = (jax.random.normal(k3, (1, 2 * H), dtype=jnp.float32)
                  * (1.0 / jnp.sqrt(2.0 * H)))
    clf_bias = jax.random.normal(k4, (1,), dtype=jnp.float32) * 0.1

    probs, logits, fused = fusion_forward(enc_outputs, masks, lu_indx,
                                          clf_weight, clf_bias)
    jax.block_until_ready((probs, logits, fused))

    # correctness check against a pure-JAX reference of the torch forward
    p_ref, l_ref, f_ref = fusion_reference(enc_outputs, masks,
                                           np.asarray(lu_indx),
                                           clf_weight, clf_bias)
    np.testing.assert_allclose(np.asarray(logits), np.asarray(l_ref),
                               rtol=1e-5, atol=1e-5)
    np.testing.assert_allclose(np.asarray(probs), np.asarray(p_ref),
                               rtol=1e-5, atol=1e-5)
    np.testing.assert_allclose(np.asarray(fused), np.asarray(f_ref),
                               rtol=1e-5, atol=1e-5)

    print("KERNEL_OK")
</pallas_src>

<mosaic_0001>
module attributes {stable_mosaic.version = 11 : i64} {
  func.func @fusion_kernel(%arg0: i32, %arg1: memref<8xi32, #tpu.memory_space<smem>>, %arg2: memref<4x4x16x128xf32, #tpu.memory_space<vmem>>, %arg3: memref<4x4x16xf32, #tpu.memory_space<vmem>>, %arg4: memref<1x128xf32, #tpu.memory_space<vmem>>, %arg5: memref<1x128xf32, #tpu.memory_space<vmem>>, %arg6: memref<1x1xf32, #tpu.memory_space<vmem>>, %arg7: memref<4x2x4xf32, #tpu.memory_space<vmem>>, %arg8: memref<4x16x128xf32, #tpu.memory_space<vmem>>, %arg9: memref<16x128xf32, #tpu.memory_space<vmem>>) attributes {dimension_semantics = [#tpu.dimension_semantics<parallel>], iteration_bounds = array<i64: 1>, scalar_prefetch = 1 : i64, scratch_operands = 1 : i64, tpu.core_type = #tpu.core_type<tc>, window_params = [{transform_indices = @transform_0, window_bounds = array<i64: 4, 4, 16, 128>}, {transform_indices = @transform_1, window_bounds = array<i64: 4, 4, 16>}, {pipeline_mode = #tpu.pipeline_mode<synchronous>, transform_indices = @transform_2, window_bounds = array<i64: 1, 128>}, {pipeline_mode = #tpu.pipeline_mode<synchronous>, transform_indices = @transform_3, window_bounds = array<i64: 1, 128>}, {pipeline_mode = #tpu.pipeline_mode<synchronous>, transform_indices = @transform_4, window_bounds = array<i64: 1, 1>}, {transform_indices = @transform_5, window_bounds = array<i64: 4, 2, 4>}, {transform_indices = @transform_6, window_bounds = array<i64: 4, 16, 128>}]} {
    %c4_i32 = arith.constant 4 : i32
    %0 = arith.muli %arg0, %c4_i32 : i32
    %c0 = arith.constant 0 : index
    %c0_0 = arith.constant 0 : index
    %1 = vector.load %arg4[%c0, %c0_0] : memref<1x128xf32, #tpu.memory_space<vmem>>, vector<1x128xf32>
    %c0_1 = arith.constant 0 : index
    %c0_2 = arith.constant 0 : index
    %2 = vector.load %arg5[%c0_1, %c0_2] : memref<1x128xf32, #tpu.memory_space<vmem>>, vector<1x128xf32>
    %c0_3 = arith.constant 0 : index
    %c0_4 = arith.constant 0 : index
    %3 = vector.load %arg6[%c0_3, %c0_4] : memref<1x1xf32, #tpu.memory_space<vmem>>, vector<1x1xf32>
    %4 = tpu.iota {dimensions = array<i32: 0>} : vector<16x128xi32>
    %5 = tpu.iota {dimensions = array<i32: 1>} : vector<1x4xi32>
    %6 = tpu.iota {dimensions = array<i32: 0>} : vector<2x4xi32>
    %c0_i32 = arith.constant 0 : i32
    %7 = vector.broadcast %c0_i32 : i32 to vector<16x128xi32>
    %8 = arith.cmpi eq, %4, %7 : vector<16x128xi32>
    %cst = arith.constant 0.000000e+00 : f32
    %9 = vector.shape_cast %1 : vector<1x128xf32> to vector<1x128xf32>
    %10 = vector.broadcast %9 : vector<1x128xf32> to vector<16x128xf32>
    %11 = vector.broadcast %cst : f32 to vector<16x128xf32>
    %12 = arith.select %8, %10, %11 : vector<16x128xi1>, vector<16x128xf32>
    %c0_i32_5 = arith.constant 0 : i32
    %c4_i32_6 = arith.constant 4 : i32
    %13 = arith.addi %c0_i32_5, %c4_i32_6 : i32
    %c1_i32 = arith.constant 1 : i32
    scf.for %arg10 = %c0_i32_5 to %13 step %c1_i32  : i32 {
      %14 = arith.addi %0, %arg10 : i32
      %c2_i32 = arith.constant 2 : i32
      %15 = arith.muli %c2_i32, %14 : i32
      %16 = arith.index_cast %15 : i32 to index
      %17 = memref.load %arg1[%16] : memref<8xi32, #tpu.memory_space<smem>>
      %18 = arith.addi %0, %arg10 : i32
      %c2_i32_8 = arith.constant 2 : i32
      %19 = arith.muli %c2_i32_8, %18 : i32
      %c1_i32_9 = arith.constant 1 : i32
      %20 = arith.addi %19, %c1_i32_9 : i32
      %21 = arith.index_cast %20 : i32 to index
      %22 = memref.load %arg1[%21] : memref<8xi32, #tpu.memory_space<smem>>
      %23 = arith.subi %22, %17 : i32
      %c1_i32_10 = arith.constant 1 : i32
      %24 = arith.maxsi %23, %c1_i32_10 : i32
      %25 = arith.sitofp %24 : i32 to f32
      %cst_11 = arith.constant 1.000000e+00 : f32
      %26 = arith.divf %cst_11, %25 : f32
      %27 = vector.broadcast %17 : i32 to vector<16x128xi32>
      %28 = arith.cmpi sge, %4, %27 : vector<16x128xi32>
      %29 = vector.broadcast %22 : i32 to vector<16x128xi32>
      %30 = arith.cmpi slt, %4, %29 : vector<16x128xi32>
      %31 = arith.andi %28, %30 : vector<16x128xi1>
      %32 = arith.extui %31 : vector<16x128xi1> to vector<16x128xi32>
      %33 = arith.sitofp %32 : vector<16x128xi32> to vector<16x128xf32>
      %34 = vector.broadcast %26 : f32 to vector<1x128xf32>
      %35 = arith.mulf %2, %34 : vector<1x128xf32>
      %36 = vector.broadcast %35 : vector<1x128xf32> to vector<16x128xf32>
      %37 = arith.mulf %33, %36 : vector<16x128xf32>
      %38 = arith.addf %37, %12 : vector<16x128xf32>
      %cst_12 = arith.constant 0.000000e+00 : f32
      %39 = vector.broadcast %cst_12 : f32 to vector<1x4xf32>
      %c0_i32_13 = arith.constant 0 : i32
      %c4_i32_14 = arith.constant 4 : i32
      %40 = arith.addi %c0_i32_13, %c4_i32_14 : i32
      %c1_i32_15 = arith.constant 1 : i32
      %41 = scf.for %arg11 = %c0_i32_13 to %40 step %c1_i32_15 iter_args(%arg12 = %39) -> (vector<1x4xf32>)  : i32 {
        %78 = arith.index_cast %arg10 : i32 to index
        %79 = arith.index_cast %arg11 : i32 to index
        %c0_35 = arith.constant 0 : index
        %c0_36 = arith.constant 0 : index
        %80 = vector.load %arg2[%78, %79, %c0_35, %c0_36] : memref<4x4x16x128xf32, #tpu.memory_space<vmem>>, vector<1x1x16x128xf32>
        %81 = vector.shape_cast %80 : vector<1x1x16x128xf32> to vector<16x128xf32>
        %82 = arith.mulf %81, %38 : vector<16x128xf32>
        %cst_37 = arith.constant dense<0.000000e+00> : vector<16xf32>
        %83 = vector.multi_reduction <add>, %82, %cst_37 [1] : vector<16x128xf32> to vector<16xf32>
        %84 = vector.shape_cast %83 : vector<16xf32> to vector<16x1xf32>
        %cst_38 = arith.constant dense<0.000000e+00> : vector<1xf32>
        %85 = vector.multi_reduction <add>, %84, %cst_38 [0] : vector<16x1xf32> to vector<1xf32>
        %86 = vector.shape_cast %85 : vector<1xf32> to vector<1x1xf32>
        %87 = vector.broadcast %arg11 : i32 to vector<1x4xi32>
        %88 = arith.cmpi eq, %5, %87 : vector<1x4xi32>
        %cst_39 = arith.constant 0.000000e+00 : f32
        %89 = vector.shape_cast %86 : vector<1x1xf32> to vector<1x1xf32>
        %90 = vector.broadcast %89 : vector<1x1xf32> to vector<1x4xf32>
        %91 = vector.broadcast %cst_39 : f32 to vector<1x4xf32>
        %92 = arith.select %88, %90, %91 : vector<1x4xi1>, vector<1x4xf32>
        %93 = arith.addf %arg12, %92 : vector<1x4xf32>
        scf.yield %93 : vector<1x4xf32>
      }
      %c4_i32_16 = arith.constant 4 : i32
      %42 = vector.broadcast %3 : vector<1x1xf32> to vector<1x4xf32>
      %43 = arith.addf %41, %42 : vector<1x4xf32>
      %cst_17 = arith.constant dense<0xFF800000> : vector<1xf32>
      %44 = vector.multi_reduction <maximumf>, %43, %cst_17 [1] : vector<1x4xf32> to vector<1xf32>
      %45 = vector.shape_cast %44 : vector<1xf32> to vector<1x1xf32>
      %46 = vector.broadcast %45 : vector<1x1xf32> to vector<1x4xf32>
      %47 = arith.subf %43, %46 : vector<1x4xf32>
      %48 = math.exp %47 : vector<1x4xf32>
      %cst_18 = arith.constant dense<0.000000e+00> : vector<1xf32>
      %49 = vector.multi_reduction <add>, %48, %cst_18 [1] : vector<1x4xf32> to vector<1xf32>
      %50 = vector.shape_cast %49 : vector<1xf32> to vector<1x1xf32>
      %51 = vector.broadcast %50 : vector<1x1xf32> to vector<1x4xf32>
      %52 = arith.divf %48, %51 : vector<1x4xf32>
      %c0_i32_19 = arith.constant 0 : i32
      %53 = vector.broadcast %c0_i32_19 : i32 to vector<2x4xi32>
      %54 = arith.cmpi eq, %6, %53 : vector<2x4xi32>
      %55 = vector.shape_cast %52 : vector<1x4xf32> to vector<1x4xf32>
      %56 = vector.broadcast %55 : vector<1x4xf32> to vector<2x4xf32>
      %57 = vector.shape_cast %43 : vector<1x4xf32> to vector<1x4xf32>
      %58 = vector.broadcast %57 : vector<1x4xf32> to vector<2x4xf32>
      %59 = arith.select %54, %56, %58 : vector<2x4xi1>, vector<2x4xf32>
      %60 = arith.index_cast %arg10 : i32 to index
      %c0_20 = arith.constant 0 : index
      %c0_21 = arith.constant 0 : index
      %61 = vector.load %arg7[%60, %c0_20, %c0_21] : memref<4x2x4xf32, #tpu.memory_space<vmem>>, vector<1x2x4xf32>
      %62 = vector.shape_cast %61 : vector<1x2x4xf32> to vector<2x4xf32>
      %63 = vector.shape_cast %59 : vector<2x4xf32> to vector<1x2x4xf32>
      tpu.vector_store %arg7[%60, %c0_20, %c0_21], %63 {strides = array<i32>} : memref<4x2x4xf32, #tpu.memory_space<vmem>>, vector<1x2x4xf32>,
      %64 = arith.index_cast %arg10 : i32 to index
      %c0_22 = arith.constant 0 : index
      %c0_23 = arith.constant 0 : index
      %65 = vector.load %arg3[%64, %c0_22, %c0_23] : memref<4x4x16xf32, #tpu.memory_space<vmem>>, vector<1x4x16xf32>
      %66 = vector.shape_cast %65 : vector<1x4x16xf32> to vector<4x16xf32>
      %67 = tpu.transpose %66, [1, 0] : vector<4x16xf32> -> vector<16x4xf32>
      %68 = vector.broadcast %52 : vector<1x4xf32> to vector<16x4xf32>
      %69 = arith.mulf %67, %68 : vector<16x4xf32>
      %cst_24 = arith.constant 0.000000e+00 : f32
      %70 = vector.broadcast %cst_24 : f32 to vector<16x128xf32>
      %c0_25 = arith.constant 0 : index
      %c0_26 = arith.constant 0 : index
      %71 = vector.load %arg9[%c0_25, %c0_26] : memref<16x128xf32, #tpu.memory_space<vmem>>, vector<16x128xf32>
      tpu.vector_store %arg9[%c0_25, %c0_26], %70 {strides = array<i32>} : memref<16x128xf32, #tpu.memory_space<vmem>>, vector<16x128xf32>,
      %c0_i32_27 = arith.constant 0 : i32
      %c4_i32_28 = arith.constant 4 : i32
      %72 = arith.addi %c0_i32_27, %c4_i32_28 : i32
      %c1_i32_29 = arith.constant 1 : i32
      scf.for %arg11 = %c0_i32_27 to %72 step %c1_i32_29  : i32 {
        %78 = arith.index_cast %arg10 : i32 to index
        %79 = arith.index_cast %arg11 : i32 to index
        %c0_35 = arith.constant 0 : index
        %c0_36 = arith.constant 0 : index
        %80 = vector.load %arg2[%78, %79, %c0_35, %c0_36] : memref<4x4x16x128xf32, #tpu.memory_space<vmem>>, vector<1x1x16x128xf32>
        %81 = vector.shape_cast %80 : vector<1x1x16x128xf32> to vector<16x128xf32>
        %82 = vector.broadcast %arg11 : i32 to vector<1x4xi32>
        %83 = arith.cmpi eq, %5, %82 : vector<1x4xi32>
        %cst_37 = arith.constant 1.000000e+00 : f32
        %cst_38 = arith.constant 0.000000e+00 : f32
        %84 = vector.broadcast %cst_37 : f32 to vector<1x4xf32>
        %85 = vector.broadcast %cst_38 : f32 to vector<1x4xf32>
        %86 = arith.select %83, %84, %85 : vector<1x4xi1>, vector<1x4xf32>
        %87 = vector.broadcast %86 : vector<1x4xf32> to vector<16x4xf32>
        %88 = arith.mulf %69, %87 : vector<16x4xf32>
        %cst_39 = arith.constant dense<0.000000e+00> : vector<16xf32>
        %89 = vector.multi_reduction <add>, %88, %cst_39 [1] : vector<16x4xf32> to vector<16xf32>
        %90 = vector.shape_cast %89 : vector<16xf32> to vector<16x1xf32>
        %c0_40 = arith.constant 0 : index
        %c0_41 = arith.constant 0 : index
        %91 = vector.load %arg9[%c0_40, %c0_41] : memref<16x128xf32, #tpu.memory_space<vmem>>, vector<16x128xf32>
        %92 = vector.broadcast %90 : vector<16x1xf32> to vector<16x128xf32>
        %93 = arith.mulf %92, %81 : vector<16x128xf32>
        %94 = arith.addf %91, %93 : vector<16x128xf32>
        %c0_42 = arith.constant 0 : index
        %c0_43 = arith.constant 0 : index
        %95 = vector.load %arg9[%c0_42, %c0_43] : memref<16x128xf32, #tpu.memory_space<vmem>>, vector<16x128xf32>
        tpu.vector_store %arg9[%c0_42, %c0_43], %94 {strides = array<i32>} : memref<16x128xf32, #tpu.memory_space<vmem>>, vector<16x128xf32>,
      }
      %c4_i32_30 = arith.constant 4 : i32
      %c0_31 = arith.constant 0 : index
      %c0_32 = arith.constant 0 : index
      %73 = vector.load %arg9[%c0_31, %c0_32] : memref<16x128xf32, #tpu.memory_space<vmem>>, vector<16x128xf32>
      %74 = arith.index_cast %arg10 : i32 to index
      %c0_33 = arith.constant 0 : index
      %c0_34 = arith.constant 0 : index
      %75 = vector.load %arg8[%74, %c0_33, %c0_34] : memref<4x16x128xf32, #tpu.memory_space<vmem>>, vector<1x16x128xf32>
      %76 = vector.shape_cast %75 : vector<1x16x128xf32> to vector<16x128xf32>
      %77 = vector.shape_cast %73 : vector<16x128xf32> to vector<1x16x128xf32>
      tpu.vector_store %arg8[%74, %c0_33, %c0_34], %77 {strides = array<i32>} : memref<4x16x128xf32, #tpu.memory_space<vmem>>, vector<1x16x128xf32>,
    }
    %c4_i32_7 = arith.constant 4 : i32
    return
  }
  func.func @transform_0(%arg0: i32, %arg1: memref<8xi32, #tpu.memory_space<smem>>) -> (i32, i32, i32, i32) {
    %c0_i32 = arith.constant 0 : i32
    %c0_i32_0 = arith.constant 0 : i32
    %c0_i32_1 = arith.constant 0 : i32
    %c0_i32_2 = arith.constant 0 : i32
    return %arg0, %c0_i32, %c0_i32_0, %c0_i32_1 : i32, i32, i32, i32
  }
  func.func @transform_1(%arg0: i32, %arg1: memref<8xi32, #tpu.memory_space<smem>>) -> (i32, i32, i32) {
    %c0_i32 = arith.constant 0 : i32
    %c0_i32_0 = arith.constant 0 : i32
    %c0_i32_1 = arith.constant 0 : i32
    return %arg0, %c0_i32, %c0_i32_0 : i32, i32, i32
  }
  func.func @transform_2(%arg0: i32, %arg1: memref<8xi32, #tpu.memory_space<smem>>) -> (i32, i32) {
    %c0_i32 = arith.constant 0 : i32
    %c0_i32_0 = arith.constant 0 : i32
    %c0_i32_1 = arith.constant 0 : i32
    return %c0_i32, %c0_i32_0 : i32, i32
  }
  func.func @transform_3(%arg0: i32, %arg1: memref<8xi32, #tpu.memory_space<smem>>) -> (i32, i32) {
    %c0_i32 = arith.constant 0 : i32
    %c0_i32_0 = arith.constant 0 : i32
    %c0_i32_1 = arith.constant 0 : i32
    return %c0_i32, %c0_i32_0 : i32, i32
  }
  func.func @transform_4(%arg0: i32, %arg1: memref<8xi32, #tpu.memory_space<smem>>) -> (i32, i32) {
    %c0_i32 = arith.constant 0 : i32
    %c0_i32_0 = arith.constant 0 : i32
    %c0_i32_1 = arith.constant 0 : i32
    return %c0_i32, %c0_i32_0 : i32, i32
  }
  func.func @transform_5(%arg0: i32, %arg1: memref<8xi32, #tpu.memory_space<smem>>) -> (i32, i32, i32) {
    %c0_i32 = arith.constant 0 : i32
    %c0_i32_0 = arith.constant 0 : i32
    %c0_i32_1 = arith.constant 0 : i32
    return %arg0, %c0_i32, %c0_i32_0 : i32, i32, i32
  }
  func.func @transform_6(%arg0: i32, %arg1: memref<8xi32, #tpu.memory_space<smem>>) -> (i32, i32, i32) {
    %c0_i32 = arith.constant 0 : i32
    %c0_i32_0 = arith.constant 0 : i32
    %c0_i32_1 = arith.constant 0 : i32
    return %arg0, %c0_i32, %c0_i32_0 : i32, i32, i32
  }
}

</mosaic_0001>

<llo_original>
// kernel: tpu_custom_call.1
$region0: #{tpu_custom_call.1}
  #allocation0 [shape = 'u32[]', space=smem, size = 0x4, offset = 0x4, fixed_abs, tag = 'smem constant byte address 0x4 - core index']
  #allocation1 [shape = 'u32[144,128]{1,0:T(1,128)}', space=vmem, size = 0x12000, scoped, tag = 'internal scratch']
  #allocation2 [shape = 'f32[16,128]{1,0:T(8,128)}', space=vmem, size = 0x2000, scoped, tag = 'scratch operand']
  #allocation3 [shape = 's32[1]{0}', space=sflag, size = 0x4, scoped, tag = 'scoped memory for tpu_custom_call.1']
  #allocation4 [shape = 'u8[512]{0}', space=smem, size = 0x200, scoped, tag = 'prefetched SMEM operand 0']
  #allocation5 [shape = 'f32[1,1]{1,0:T(1,128)S(1)}', space=vmem, size = 0x200, scoped, tag = 'scoped memory for tpu_custom_call.1']
  %s0 = inlined_call_operand.vmem [shape: s32[8], index: 0, kind: input, shape index: {}]
  %s1 = inlined_call_operand.hbm [shape: f32[4,4,16,128], index: 1, kind: input, shape index: {}]
  %s2 = inlined_call_operand.hbm [shape: f32[4,4,16], index: 2, kind: input, shape index: {}]
  %s3 = inlined_call_operand.vmem [shape: f32[1,128], index: 3, kind: input, shape index: {}]
  %s4 = inlined_call_operand.vmem [shape: f32[1,128], index: 4, kind: input, shape index: {}]
  %s5 = inlined_call_operand.<no memory space> [shape: f32[1,1], index: 5, kind: input, shape index: {}]
  %s6 = inlined_call_operand.hbm [shape: f32[4,2,4], index: 6, kind: output, shape index: {0}]
  %s7 = inlined_call_operand.hbm [shape: f32[4,16,128], index: 7, kind: output, shape index: {1}]
  %8 = xla_tuple %s6, %s7
  %s9 = sld [smem:[#allocation0]]
  $region67: #{tpu_custom_call.1} parent=0
    _
  %s11 = ssub.s32 1, %s9
  %s12 = scalar_select 0, %s11, %s9
  %s13 = sshll.u32 %s0, 4
  %s14 = int_to_ptr.vmem [resolvable:$true] %s13
  %16 = dma.vmem_to_smem %s14, 16, [#allocation4], [#allocation3]
  %v17 = vstv %s5
  %18 = vst [vmem:[#allocation5] sm:$0x1] %v17
  %19 = dma.done [#allocation3], 16
  %20 = sfence
  $region1: #{tpu_custom_call.1} parent=0
    #allocation6 [shape = 'u8[131072]{0}', space=vmem, size = 0x20000, scoped, tag = 'input window, operand 1, single buffered']
    #allocation7 [shape = 's32[1]{0}', space=sflag, size = 0x4, scoped, tag = 'scoped memory for tpu_custom_call.1']
    #allocation8 [shape = 's32[1]{0}', space=sflag, size = 0x4, scoped, tag = 'scoped memory for tpu_custom_call.1']
    #allocation9 [shape = 'u8[8192]{0}', space=vmem, size = 0x2000, scoped, tag = 'input window, operand 2, single buffered']
    #allocation10 [shape = 's32[1]{0}', space=sflag, size = 0x4, scoped, tag = 'scoped memory for tpu_custom_call.1']
    #allocation11 [shape = 'u8[4096]{0}', space=vmem, size = 0x1000, scoped, tag = 'output window, operand 0, single buffered']
    #allocation12 [shape = 'u8[32768]{0}', space=vmem, size = 0x8000, scoped, tag = 'output window, operand 1, single buffered']
    #allocation13 [shape = 's32[1]{0}', space=sflag, size = 0x4, scoped, tag = 'scoped memory for tpu_custom_call.1']
    %21 = vsyncpa [#allocation7], 0
    %22 = vsyncpa [#allocation10], 0
    %23 = vsyncpa [#allocation8], 0
    %24 = vsyncpa [#allocation13], 0
    // Predicated region
    $region2: #{tpu_custom_call.1} parent=1 // pred_check
      _
    $region3: #{tpu_custom_call.1} parent=1 // pred_check_branch
      %26 = sbr.rel (0) target = $region5
    $region4: #{tpu_custom_call.1} parent=1 // pred_region
      %s28 = ssub.s32 4096, 4096
      %29 = vsyncadd [#allocation7], %s28
      %s30 = sshll.u32 [#allocation6], 4
      %s31 = int_to_ptr.vmem [resolvable:$true] %s30
      %36 = dma.hbm_to_vmem [thread:$0]  %s1, 4096, %s31, [#allocation7], 128, 128, 8
    $region5: #{tpu_custom_call.1} parent=1 // pred_fallthru
      _
    // Predicated region
    $region6: #{tpu_custom_call.1} parent=1 // pred_check
      _
    $region7: #{tpu_custom_call.1} parent=1 // pred_check_branch
      %38 = sbr.rel (0) target = $region9
    $region8: #{tpu_custom_call.1} parent=1 // pred_region
      %s40 = ssub.s32 256, 256
      %41 = vsyncadd [#allocation10], %s40
      %s42 = sshll.u32 [#allocation9], 4
      %s43 = int_to_ptr.vmem [resolvable:$true] %s42
      %48 = dma.hbm_to_vmem [thread:$0]  %s2, 256, %s43, [#allocation10], 64, 64, 4
    $region9: #{tpu_custom_call.1} parent=1 // pred_fallthru
      _
    // Predicated region
    $region10: #{tpu_custom_call.1} parent=1 // pred_check
      _
    $region11: #{tpu_custom_call.1} parent=1 // pred_check_branch
      %50 = sbr.rel (0) target = $region13
    $region12: #{tpu_custom_call.1} parent=1 // pred_region
      _
    $region13: #{tpu_custom_call.1} parent=1 // pred_fallthru
      _
    // Predicated region
    $region14: #{tpu_custom_call.1} parent=1 // pred_check
      _
    $region15: #{tpu_custom_call.1} parent=1 // pred_check_branch
      %52 = sbr.rel (0) target = $region17
    $region16: #{tpu_custom_call.1} parent=1 // pred_region
      _
    $region17: #{tpu_custom_call.1} parent=1 // pred_fallthru
      _
    // Predicated region
    $region18: #{tpu_custom_call.1} parent=1 // pred_check
      _
    $region19: #{tpu_custom_call.1} parent=1 // pred_check_branch
      %54 = sbr.rel (0) target = $region21
    $region20: #{tpu_custom_call.1} parent=1 // pred_region
      _
    $region21: #{tpu_custom_call.1} parent=1 // pred_fallthru
      _
    // Predicated region
    $region22: #{tpu_custom_call.1} parent=1 // pred_check
      _
    $region23: #{tpu_custom_call.1} parent=1 // pred_check_branch
      %56 = sbr.rel (0) target = $region25
    $region24: #{tpu_custom_call.1} parent=1 // pred_region
      %57 = dma.done [#allocation7], 4096
    $region25: #{tpu_custom_call.1} parent=1 // pred_fallthru
      _
    // Predicated region
    $region26: #{tpu_custom_call.1} parent=1 // pred_check
      _
    $region27: #{tpu_custom_call.1} parent=1 // pred_check_branch
      %59 = sbr.rel (0) target = $region29
    $region28: #{tpu_custom_call.1} parent=1 // pred_region
      %60 = dma.done [#allocation10], 256
    $region29: #{tpu_custom_call.1} parent=1 // pred_fallthru
      _
    %s61 = smul.u32 0, 4
    %v62 = vld [vmem:[%s3] sm:$0x1]
    %v63 = vld [vmem:[%s4] sm:$0x1]
    %v64 = vld [vmem:[#allocation5] sm:$0x1]
    %v65 = vlaneseq
    %v66 = vshrl.u32 %v65, 7
    %v67 = vadd.s32 %v66, 8
    %v68 = vlaneseq
    %v69 = vand.u32 %v68, 127
    %vm70 = vcmp.eq.s32.totalorder %v66, 0
    %vm71 = vcmp.eq.s32.totalorder %v67, 0
    %v73 = vlaneseq
    %v74 = vshrl.u32 %v73, 7
    %v75 = vsub.s32 0, %v74
    %v76 = vrot.slane %v62, %v75
    %v78 = vsel %vm70, %v76, 0.0
    %v79 = vsel %vm71, %v76, 0.0
    loop: start=0, step=1, limit=4
    $region30: #{tpu_custom_call.1} parent=1 // loop_pre_header
      _
    $region31: #{tpu_custom_call.1} parent=1 // loop_header
      %s81 = sphi 0, %s85
      %p82 = scmp.ge.s32.totalorder %s81, 4
    $region32: #{tpu_custom_call.1} parent=1 // loop_header_branch
      %84 = sbr.rel (%p82) target = $region36
    $region33: #{tpu_custom_call.1} parent=1 // loop_body
      %s86 = sadd.s32 %s61, %s81
      %s87 = smul.u32 %s86, 2
      %s88 = sld [smem:[#allocation4 + %s87]]
      %s89 = sadd.s32 %s87, 1
      %s90 = sld [smem:[#allocation4 + %s89]]
      %s91 = ssub.s32 %s90, %s88
      %p92 = scmp.gt.s32.totalorder %s91, 1
      %s93 = scalar_select %p92, %s91, 1
      %s94 = scvt.s32.f32 %s93
      %v95 = vstv %s94
      %v96 = vrcp.pop %v95
      %s97 = vtos %v96
      %v98 = vstv %s88
      %vm99 = vcmp.ge.s32.totalorder %v66, %v98
      %vm100 = vcmp.ge.s32.totalorder %v67, %v98
      %v101 = vstv %s90
      %vm102 = vcmp.lt.s32.totalorder %v66, %v101
      %vm103 = vcmp.lt.s32.totalorder %v67, %v101
      %vm104 = vmand %vm99, %vm102
      %vm105 = vmand %vm100, %vm103
      %v106 = vsel %vm104, 1, 0
      %v107 = vsel %vm105, 1, 0
      %v108 = vcvt.s32.f32 %v106
      %v109 = vcvt.s32.f32 %v107
      %v110 = vstv %s97
      %v111 = vmul.f32 %v63, %v110
      %v113 = vlaneseq
      %v114 = vshrl.u32 %v113, 7
      %v115 = vsub.s32 0, %v114
      %v116 = vrot.slane %v111, %v115
      %v118 = vmul.f32 %v108, %v116
      %v119 = vmul.f32 %v109, %v116
      %v120 = vadd.f32 %v118, %v78
      %v121 = vadd.f32 %v119, %v79
      loop: start=0, step=1, limit=4
      $region37: #{tpu_custom_call.1} parent=33 // loop_pre_header
        _
      $region38: #{tpu_custom_call.1} parent=33 // loop_header
        %s123 = sphi 0, %s127
        %p124 = scmp.ge.s32.totalorder %s123, 4
        %v128 = vphi 0.0, %v151
      $region39: #{tpu_custom_call.1} parent=33 // loop_header_branch
        %126 = sbr.rel (%p124) target = $region43
      $region40: #{tpu_custom_call.1} parent=33 // loop_body
        %s129 = smul.u32 %s123, 16
        %s130 = smul.u32 %s81, 64
        %s131 = sadd.s32 %s129, %s130
        %s132 = scalar_lea.vmem [#allocation6], %s131
        %v133 = vld [vmem:[%s132] sm:$0xff]
        %v134 = vld [vmem:[%s132 + $0x8] sm:$0xff]
        %v135 = vmul.f32 %v133, %v120
        %v136 = vmul.f32 %v134, %v121
        %137 = vadd.xlane.f32.xlu0 %v135
        %v138 = vpop.xlane.xlu0 %137
        %139 = vadd.xlane.f32.xlu0 %v136
        %v140 = vpop.xlane.xlu0 %139
        %v141 = vadd.f32 %v138, %v140
        %v142 = vrot.slane %v141, 4
        %v143 = vadd.f32 %v141, %v142
        %v144 = vrot.slane %v143, 2
        %v145 = vadd.f32 %v143, %v144
        %v146 = vrot.slane %v145, 1
        %v147 = vadd.f32 %v145, %v146
        %v148 = vstv %s123
        %vm149 = vcmp.eq.s32.totalorder %v69, %v148
        %v150 = vsel %vm149, %v147, 0.0
        %v151 = vadd.f32 %v128, %v150
      $region41: #{tpu_custom_call.1} parent=33 // loop_footer
        %s127 = sadd.s32 1, %s123
      $region42: #{tpu_custom_call.1} parent=33 // loop_footer_branch
        %122 = sbr.rel target = $region38
      $region43: #{tpu_custom_call.1} parent=33 // loop_exit
        _
      %153 = vset.pattern.permute.xlu0 0
      %154 = vperm.xlu0 %153, %v64
      %v155 = vpop.permute.xlu0 %154
      %v157 = vlaneseq
      %v158 = vshrl.u32 %v157, 7
      %v159 = vsub.s32 0, %v158
      %v160 = vrot.slane %v155, %v159
      %v161 = vadd.f32 %v128, %v160
      %vm162 = vcmask 31744
      %v163 = vsel %vm162, %v161, -inf
      %164 = vmax.xlane.f32.xlu0 %v163
      %v165 = vpop.xlane.xlu0 %164
      %v166 = vsub.f32 %v161, %v165
      %v167 = vmul.f32 %v166, 1.442695
      %v168 = vpow.pop %v167
      %v169 = vsel %vm162, %v168, 0.0
      %170 = vadd.xlane.f32.xlu0 %v169
      %v171 = vpop.xlane.xlu0 %170
      %v172 = vrcp.pop %v171
      %v173 = vmul.f32 %v168, %v172
      %v174 = vsel %vm70, %v173, %v161
      %s175 = smul.u32 %s81, 2
      %s176 = scalar_lea.vmem [#allocation11], %s175
      %vm177 = vcmask 25600
      %178 = vst.msk [vmem:[%s176] sm:$0x3] %vm177, %v174
      %s179 = smul.u32 %s81, 4
      %s180 = scalar_lea.vmem [#allocation9], %s179
      %v181 = vld [vmem:[%s180] sm:$0xf]
      %182 = vxpose.xlu0.b32.start [1/16] %v181, 128
      %183 = vxpose.xlu0.b32.cont [2/16] 0.0, 128
      %184 = vxpose.xlu0.b32.cont [3/16] 0.0, 128
      %185 = vxpose.xlu0.b32.cont [4/16] 0.0, 128
      %186 = vxpose.xlu0.b32.cont [5/16] 0.0, 128
      %187 = vxpose.xlu0.b32.cont [6/16] 0.0, 128
      %188 = vxpose.xlu0.b32.cont [7/16] 0.0, 128
      %189 = vxpose.xlu0.b32.cont [8/16] 0.0, 128
      %190 = vxpose.xlu0.b32.cont [9/16] 0.0, 128
      %191 = vxpose.xlu0.b32.cont [10/16] 0.0, 128
      %192 = vxpose.xlu0.b32.cont [11/16] 0.0, 128
      %193 = vxpose.xlu0.b32.cont [12/16] 0.0, 128
      %194 = vxpose.xlu0.b32.cont [13/16] 0.0, 128
      %195 = vxpose.xlu0.b32.cont [14/16] 0.0, 128
      %196 = vxpose.xlu0.b32.cont [15/16] 0.0, 128
      %197 = vxpose.xlu0.b32.end [16/16] 0.0, 128
      %v198 = vpop.trf.xlu0
      %v199 = vpop.trf.xlu0
      %v200 = vpop.trf.xlu0
      %v201 = vpop.trf.xlu0
      %v202 = vpop.trf.xlu0
      %v203 = vpop.trf.xlu0
      %v204 = vpop.trf.xlu0
      %v205 = vpop.trf.xlu0
      %v206 = vpop.trf.xlu0
      %v207 = vpop.trf.xlu0
      %v208 = vpop.trf.xlu0
      %v209 = vpop.trf.xlu0
      %v210 = vpop.trf.xlu0
      %v211 = vpop.trf.xlu0
      %v212 = vpop.trf.xlu0
      %v213 = vpop.trf.xlu0
      %v214 = vmul.f32 %v198, %v173
      %v215 = vmul.f32 %v199, %v173
      %216 = vst [vmem:[#allocation2] sm:$0xff] 0.0
      %217 = vst [vmem:[#allocation2 + $0x8] sm:$0xff] 0.0
      loop: start=0, step=1, limit=4
      $region44: #{tpu_custom_call.1} parent=33 // loop_pre_header
        _
      $region45: #{tpu_custom_call.1} parent=33 // loop_header
        %s219 = sphi 0, %s223
        %p220 = scmp.ge.s32.totalorder %s219, 4
      $region46: #{tpu_custom_call.1} parent=33 // loop_header_branch
        %222 = sbr.rel (%p220) target = $region50
      $region47: #{tpu_custom_call.1} parent=33 // loop_body
        %s224 = smul.u32 %s219, 16
        %s225 = smul.u32 %s81, 64
        %s226 = sadd.s32 %s224, %s225
        %s227 = scalar_lea.vmem [#allocation6], %s226
        %v228 = vld [vmem:[%s227] sm:$0xff]
        %v229 = vld [vmem:[%s227 + $0x8] sm:$0xff]
        %v230 = vstv %s219
        %vm231 = vcmp.eq.s32.totalorder %v69, %v230
        %v232 = vsel %vm231, 1.0, 0.0
        %v233 = vmul.f32 %v214, %v232
        %v234 = vmul.f32 %v215, %v232
        %v235 = vsel %vm162, %v233, 0.0
        %236 = vadd.xlane.f32.xlu0 %v235
        %v237 = vpop.xlane.xlu0 %236
        %v238 = vsel %vm162, %v234, 0.0
        %239 = vadd.xlane.f32.xlu0 %v238
        %v240 = vpop.xlane.xlu0 %239
        %v241 = vld [vmem:[#allocation2] sm:$0xff]
        %v242 = vld [vmem:[#allocation2 + $0x8] sm:$0xff]
        %v243 = vmul.f32 %v237, %v228
        %v244 = vmul.f32 %v240, %v229
        %v245 = vadd.f32 %v241, %v243
        %v246 = vadd.f32 %v242, %v244
        %247 = vst [vmem:[#allocation2] sm:$0xff] %v245
        %248 = vst [vmem:[#allocation2 + $0x8] sm:$0xff] %v246
      $region48: #{tpu_custom_call.1} parent=33 // loop_footer
        %s223 = sadd.s32 1, %s219
      $region49: #{tpu_custom_call.1} parent=33 // loop_footer_branch
        %218 = sbr.rel target = $region45
      $region50: #{tpu_custom_call.1} parent=33 // loop_exit
        _
      %v249 = vld [vmem:[#allocation2] sm:$0xff]
      %v250 = vld [vmem:[#allocation2 + $0x8] sm:$0xff]
      %s251 = smul.u32 %s81, 16
      %s252 = scalar_lea.vmem [#allocation12], %s251
      %253 = vst [vmem:[%s252] sm:$0xff] %v249
      %254 = vst [vmem:[%s252 + $0x8] sm:$0xff] %v250
    $region34: #{tpu_custom_call.1} parent=1 // loop_footer
      %s85 = sadd.s32 1, %s81
    $region35: #{tpu_custom_call.1} parent=1 // loop_footer_branch
      %80 = sbr.rel target = $region31
    $region36: #{tpu_custom_call.1} parent=1 // loop_exit
      _
    // Predicated region
    $region51: #{tpu_custom_call.1} parent=1 // pred_check
      _
    $region52: #{tpu_custom_call.1} parent=1 // pred_check_branch
      %256 = sbr.rel (0) target = $region54
    $region53: #{tpu_custom_call.1} parent=1 // pred_region
      %s258 = ssub.s32 128, 128
      %259 = vsyncadd [#allocation8], %s258
      %s260 = sshll.u32 [#allocation11], 4
      %s261 = int_to_ptr.vmem [resolvable:$true] %s260
      %266 = dma.vmem_to_hbm [thread:$0]  %s261, 128, %s6, [#allocation8], 32, 32, 2
    $region54: #{tpu_custom_call.1} parent=1 // pred_fallthru
      _
    // Predicated region
    $region55: #{tpu_custom_call.1} parent=1 // pred_check
      _
    $region56: #{tpu_custom_call.1} parent=1 // pred_check_branch
      %268 = sbr.rel (0) target = $region58
    $region57: #{tpu_custom_call.1} parent=1 // pred_region
      %s270 = ssub.s32 1024, 1024
      %271 = vsyncadd [#allocation13], %s270
      %s272 = sshll.u32 [#allocation12], 4
      %s273 = int_to_ptr.vmem [resolvable:$true] %s272
      %278 = dma.vmem_to_hbm [thread:$0]  %s273, 1024, %s7, [#allocation13], 128, 128, 8
    $region58: #{tpu_custom_call.1} parent=1 // pred_fallthru
      _
    // Predicated region
    $region59: #{tpu_custom_call.1} parent=1 // pred_check
      _
    $region60: #{tpu_custom_call.1} parent=1 // pred_check_branch
      %280 = sbr.rel (0) target = $region62
    $region61: #{tpu_custom_call.1} parent=1 // pred_region
      %281 = dma.done [#allocation8], 128
    $region62: #{tpu_custom_call.1} parent=1 // pred_fallthru
      _
    // Predicated region
    $region63: #{tpu_custom_call.1} parent=1 // pred_check
      _
    $region64: #{tpu_custom_call.1} parent=1 // pred_check_branch
      %283 = sbr.rel (0) target = $region66
    $region65: #{tpu_custom_call.1} parent=1 // pred_region
      %284 = dma.done [#allocation13], 1024
    $region66: #{tpu_custom_call.1} parent=1 // pred_fallthru
      _
    %285 = vsyncpa [#allocation7], 1
    %286 = vsyncpa [#allocation10], 1
    %287 = vsyncpa [#allocation8], 1
    %288 = vsyncpa [#allocation13], 1

</llo_original>
